<compile_context>
chip_gen: v7x
topology: tpu7x:2x2x1
jax: 0.10.0
libtpu: 0.0.40
codegen_flags: <defaults>
</compile_context>

<pallas_src>
import jax
import jax.numpy as jnp
from jax import lax
from jax.experimental import pallas as pl
from jax.experimental.pallas import tpu as pltpu

LANE = 128  # TPU lane width; batch is the lane axis of the (transposed) output


def _round_up(a, b):
    return ((a + b - 1) // b) * b


def toy_mlp_kernel(x_ref, w1_ref, b1_ref, w2_ref, b2_ref, o_ref):
    """One batch tile: o[f_pad, TB] = (relu(x @ w1^T + b1) @ w2_pad^T + b2)^T."""
    x = x_ref[...]                                    # [TB, 10]
    # net1: contract the shared "in" dim (w1 kept in PyTorch [out, in] layout).
    h = lax.dot_general(
        x, w1_ref[...],
        dimension_numbers=(((1,), (1,)), ((), ())),
        preferred_element_type=jnp.float32)           # [TB, 10] f32 accumulate
    h = jnp.maximum(h + b1_ref[...].astype(jnp.float32), 0.0).astype(x.dtype)
    # net2, emitted transposed: w2_pad[f_pad, 10] . h[TB, 10]^T -> [f_pad, TB].
    # Batch lands on the lane axis -> dense, full-lane stores of only f_pad rows.
    y_t = lax.dot_general(
        w2_ref[...], h,
        dimension_numbers=(((1,), (1,)), ((), ())),
        preferred_element_type=jnp.float32)           # [f_pad, TB] f32
    y_t = y_t + b2_ref[...].astype(jnp.float32)       # bias [f_pad, 1] broadcast
    o_ref[...] = y_t.astype(o_ref.dtype)


def toy_model_forward(x, w1, b1, w2, b2, *, block_b=4096):
    """ToyModel forward.

    x: [B, 10]; w1: [10, 10] (out, in); b1: [10]; w2: [5, 10] (out, in); b2: [5].
    Compute dtype follows x.dtype (pass bf16 x for the bf16 path; the wrapper
    never casts the large activation tensor itself).
    """
    B, f_in = x.shape
    f_hidden = w1.shape[0]
    f_out = w2.shape[0]
    dtype = x.dtype

    # Pad out-features only to the sublane granularity of the compute dtype.
    sub = 8 if jnp.dtype(dtype).itemsize == 4 else 16
    f_pad = max(sub, _round_up(f_out, sub))           # 5 -> 8 (f32) / 16 (bf16)

    w1_c = w1.astype(dtype)
    w2_pad = jnp.zeros((f_pad, f_hidden), dtype).at[:f_out].set(w2.astype(dtype))
    b1_2d = b1.reshape(1, f_hidden).astype(jnp.float32)
    b2_pad = jnp.zeros((f_pad, 1), jnp.float32).at[:f_out, 0].set(
        b2.astype(jnp.float32))

    # Batch tiling: batch is the lane axis of the transposed output, so the
    # tile must be a multiple of 128.  Cap the tile so the grid has >= 2 steps
    # whenever possible (v7x megacore), and pad B up to a multiple of the tile.
    b_min = _round_up(B, LANE)
    tb = _round_up(min(max(block_b, LANE), b_min), LANE)
    if b_min >= 2 * LANE:
        tb = min(tb, _round_up((b_min + 1) // 2, LANE))
    b_pad = _round_up(B, tb)
    x_in = x if b_pad == B else jnp.pad(x, ((0, b_pad - B), (0, 0)))
    grid = (b_pad // tb,)

    out_t = pl.pallas_call(
        toy_mlp_kernel,
        out_shape=jax.ShapeDtypeStruct((f_pad, b_pad), dtype),
        grid=grid,
        in_specs=[
            pl.BlockSpec((tb, f_in), lambda i: (i, 0)),         # x: batch-tiled
            pl.BlockSpec((f_hidden, f_in), lambda i: (0, 0)),   # w1: VMEM-resident
            pl.BlockSpec((1, f_hidden), lambda i: (0, 0)),      # b1: VMEM-resident
            pl.BlockSpec((f_pad, f_hidden), lambda i: (0, 0)),  # w2 (8/16-padded)
            pl.BlockSpec((f_pad, 1), lambda i: (0, 0)),         # b2 (8/16-padded)
        ],
        out_specs=pl.BlockSpec((f_pad, tb), lambda i: (0, i)),  # transposed out
        compiler_params=pltpu.CompilerParams(
            # Batch steps are independent -> shard across v7x's 2 TensorCores.
            dimension_semantics=("parallel",),
        ),
    )(x_in, w1_c, b1_2d, w2_pad, b2_pad)

    # Undo out-feature padding and the transpose (tiny [5, B] -> [B, 5] fixup).
    return out_t[:f_out, :B].T


def reference_forward(x, w1, b1, w2, b2):
    h = jnp.maximum(x @ w1.T + b1, 0.0)
    return h @ w2.T + b2


if __name__ == "__main__":
    key = jax.random.PRNGKey(0)
    kx, k1, k2, k3, k4 = jax.random.split(key, 5)

    # Small, deliberately non-multiple-of-128 batch: default tiling pads to
    # 512 and runs a 2-step grid; the block_b=128 call exercises a 3-step grid.
    B = 300
    x = jax.random.normal(kx, (B, 10), dtype=jnp.float32)

    # nn.Linear-style uniform(-1/sqrt(in), 1/sqrt(in)) init, [out, in] layout.
    bound = 1.0 / jnp.sqrt(10.0)
    w1 = jax.random.uniform(k1, (10, 10), jnp.float32, -bound, bound)
    b1 = jax.random.uniform(k2, (10,), jnp.float32, -bound, bound)
    w2 = jax.random.uniform(k3, (5, 10), jnp.float32, -bound, bound)
    b2 = jax.random.uniform(k4, (5,), jnp.float32, -bound, bound)

    y_ref = reference_forward(x, w1, b1, w2, b2)

    # f32 path, default (large) batch tile -> grid=(2,).
    y = toy_model_forward(x, w1, b1, w2, b2)
    jax.block_until_ready(y)
    assert y.shape == (B, 5)
    assert jnp.allclose(y, y_ref, atol=1e-5, rtol=1e-5), "f32 mismatch vs reference"

    # Smaller tile -> grid=(3,), exercising multi-step pipelining + padding.
    y_small = toy_model_forward(x, w1, b1, w2, b2, block_b=128)
    jax.block_until_ready(y_small)
    assert jnp.allclose(y_small, y_ref, atol=1e-5, rtol=1e-5), \
        "small-tile mismatch vs reference"

    # bf16 path: the *caller* already holds bf16 activations (the wrapper does
    # not cast the big tensor); f32 accumulation is kept inside the kernel.
    x_bf16 = x.astype(jnp.bfloat16)
    y_bf16 = toy_model_forward(x_bf16, w1, b1, w2, b2)
    jax.block_until_ready(y_bf16)
    assert y_bf16.shape == (B, 5)
    assert jnp.allclose(y_bf16.astype(jnp.float32), y_ref, atol=1e-1, rtol=1e-1), \
        "bf16 mismatch vs reference"

    print("KERNEL_OK")
</pallas_src>

<mosaic_0001>
module attributes {stable_mosaic.version = 11 : i64} {
  func.func @toy_mlp_kernel(%arg0: i32, %arg1: memref<256x10xf32, #tpu.memory_space<vmem>>, %arg2: memref<10x10xf32, #tpu.memory_space<vmem>>, %arg3: memref<1x10xf32, #tpu.memory_space<vmem>>, %arg4: memref<8x10xf32, #tpu.memory_space<vmem>>, %arg5: memref<8x1xf32, #tpu.memory_space<vmem>>, %arg6: memref<8x256xf32, #tpu.memory_space<vmem>>) attributes {dimension_semantics = [#tpu.dimension_semantics<parallel>], iteration_bounds = array<i64: 2>, scalar_prefetch = 0 : i64, scratch_operands = 0 : i64, tpu.core_type = #tpu.core_type<tc>, window_params = [{transform_indices = @transform_0, window_bounds = array<i64: 256, 10>}, {pipeline_mode = #tpu.pipeline_mode<synchronous>, transform_indices = @transform_1, window_bounds = array<i64: 10, 10>}, {pipeline_mode = #tpu.pipeline_mode<synchronous>, transform_indices = @transform_2, window_bounds = array<i64: 1, 10>}, {pipeline_mode = #tpu.pipeline_mode<synchronous>, transform_indices = @transform_3, window_bounds = array<i64: 8, 10>}, {pipeline_mode = #tpu.pipeline_mode<synchronous>, transform_indices = @transform_4, window_bounds = array<i64: 8, 1>}, {transform_indices = @transform_5, window_bounds = array<i64: 8, 256>}]} {
    %c0 = arith.constant 0 : index
    %c0_0 = arith.constant 0 : index
    %0 = vector.load %arg1[%c0, %c0_0] : memref<256x10xf32, #tpu.memory_space<vmem>>, vector<256x10xf32>
    %c0_1 = arith.constant 0 : index
    %c0_2 = arith.constant 0 : index
    %1 = vector.load %arg2[%c0_1, %c0_2] : memref<10x10xf32, #tpu.memory_space<vmem>>, vector<10x10xf32>
    %cst = arith.constant dense<0.000000e+00> : vector<256x10xf32>
    %2 = tpu.matmul %0, %1, %cst {dimension_numbers = #tpu.dot_dimension_numbers<[1], [1], [0], [0], [0, 0, 1, 0], [], []>} : vector<256x10xf32>, vector<10x10xf32>, vector<256x10xf32> -> vector<256x10xf32>
    %c0_3 = arith.constant 0 : index
    %c0_4 = arith.constant 0 : index
    %3 = vector.load %arg3[%c0_3, %c0_4] : memref<1x10xf32, #tpu.memory_space<vmem>>, vector<1x10xf32>
    %4 = vector.broadcast %3 : vector<1x10xf32> to vector<256x10xf32>
    %5 = arith.addf %2, %4 : vector<256x10xf32>
    %cst_5 = arith.constant 0.000000e+00 : f32
    %6 = vector.broadcast %cst_5 : f32 to vector<256x10xf32>
    %7 = arith.maximumf %5, %6 : vector<256x10xf32>
    %c0_6 = arith.constant 0 : index
    %c0_7 = arith.constant 0 : index
    %8 = vector.load %arg4[%c0_6, %c0_7] : memref<8x10xf32, #tpu.memory_space<vmem>>, vector<8x10xf32>
    %cst_8 = arith.constant dense<0.000000e+00> : vector<8x256xf32>
    %9 = tpu.matmul %8, %7, %cst_8 {dimension_numbers = #tpu.dot_dimension_numbers<[1], [1], [0], [0], [0, 0, 1, 0], [], []>} : vector<8x10xf32>, vector<256x10xf32>, vector<8x256xf32> -> vector<8x256xf32>
    %c0_9 = arith.constant 0 : index
    %c0_10 = arith.constant 0 : index
    %10 = vector.load %arg5[%c0_9, %c0_10] : memref<8x1xf32, #tpu.memory_space<vmem>>, vector<8x1xf32>
    %11 = vector.broadcast %10 : vector<8x1xf32> to vector<8x256xf32>
    %12 = arith.addf %9, %11 : vector<8x256xf32>
    %c0_11 = arith.constant 0 : index
    %c0_12 = arith.constant 0 : index
    %13 = vector.load %arg6[%c0_11, %c0_12] : memref<8x256xf32, #tpu.memory_space<vmem>>, vector<8x256xf32>
    tpu.vector_store %arg6[%c0_11, %c0_12], %12 {strides = array<i32>} : memref<8x256xf32, #tpu.memory_space<vmem>>, vector<8x256xf32>,
    return
  }
  func.func @transform_0(%arg0: i32) -> (i32, i32) {
    %c0_i32 = arith.constant 0 : i32
    %c0_i32_0 = arith.constant 0 : i32
    return %arg0, %c0_i32 : i32, i32
  }
  func.func @transform_1(%arg0: i32) -> (i32, i32) {
    %c0_i32 = arith.constant 0 : i32
    %c0_i32_0 = arith.constant 0 : i32
    %c0_i32_1 = arith.constant 0 : i32
    return %c0_i32, %c0_i32_0 : i32, i32
  }
  func.func @transform_2(%arg0: i32) -> (i32, i32) {
    %c0_i32 = arith.constant 0 : i32
    %c0_i32_0 = arith.constant 0 : i32
    %c0_i32_1 = arith.constant 0 : i32
    return %c0_i32, %c0_i32_0 : i32, i32
  }
  func.func @transform_3(%arg0: i32) -> (i32, i32) {
    %c0_i32 = arith.constant 0 : i32
    %c0_i32_0 = arith.constant 0 : i32
    %c0_i32_1 = arith.constant 0 : i32
    return %c0_i32, %c0_i32_0 : i32, i32
  }
  func.func @transform_4(%arg0: i32) -> (i32, i32) {
    %c0_i32 = arith.constant 0 : i32
    %c0_i32_0 = arith.constant 0 : i32
    %c0_i32_1 = arith.constant 0 : i32
    return %c0_i32, %c0_i32_0 : i32, i32
  }
  func.func @transform_5(%arg0: i32) -> (i32, i32) {
    %c0_i32 = arith.constant 0 : i32
    %c0_i32_0 = arith.constant 0 : i32
    return %c0_i32, %arg0 : i32, i32
  }
}

</mosaic_0001>

<llo_original>
// kernel: tpu_custom_call.1
$region0: #{tpu_custom_call.1}
  #allocation0 [shape = 'u32[]', space=smem, size = 0x4, offset = 0x4, fixed_abs, tag = 'smem constant byte address 0x4 - core index']
  #allocation1 [shape = 'u32[144,128]{1,0:T(1,128)}', space=vmem, size = 0x12000, scoped, tag = 'internal scratch']
  %s0 = inlined_call_operand.vmem [shape: f32[512,10], index: 0, kind: input, shape index: {}]
  %s1 = inlined_call_operand.vmem [shape: f32[10,10], index: 1, kind: input, shape index: {}]
  %s2 = inlined_call_operand.vmem [shape: f32[1,10], index: 2, kind: input, shape index: {}]
  %s3 = inlined_call_operand.vmem [shape: f32[8,10], index: 3, kind: input, shape index: {}]
  %s4 = inlined_call_operand.vmem [shape: f32[8,1], index: 4, kind: input, shape index: {}]
  %s5 = inlined_call_operand.hbm [shape: f32[8,512], index: 5, kind: output, shape index: {}]
  %s6 = sld [smem:[#allocation0]]
  $region53: #{tpu_custom_call.1} parent=0
    _
  %s8 = ssub.s32 1, %s6
  %s9 = scalar_select 0, %s8, %s6
  $region1: #{tpu_custom_call.1} parent=0
    #allocation2 [shape = 'u8[16384]{0}', space=vmem, size = 0x4000, scoped, tag = 'output window, operand 0']
    #allocation3 [shape = 's32[2]{0}', space=sflag, size = 0x8, scoped, tag = 'scoped memory for tpu_custom_call.1']
    %10 = vsyncpa [#allocation3], 0
    %s11 = scalar_lea.sflag [#allocation3], 1
    %12 = vsyncpa %s11, 0
    loop: start=0, step=1, limit=4
    $region2: #{tpu_custom_call.1} parent=1 // loop_pre_header
      _
    $region3: #{tpu_custom_call.1} parent=1 // loop_header
      %s14 = sphi 0, %s18
      %p15 = scmp.ge.s32.totalorder %s14, 4
      %s24 = sphi 0, %s26
      %s27 = sphi 0, %s24
      %s28 = sphi 0, %s27
      %s44 = sphi 0, %s28
      %s48 = sphi 0, %s48
      %s50 = sphi 0, %s48
      %s51 = sphi 0, %s50
      %s65 = sphi 0, %s51
      %s69 = sphi 0, %s69
      %s71 = sphi 0, %s69
      %s72 = sphi 0, %s71
      %s86 = sphi 0, %s72
      %s90 = sphi 0, %s90
      %s92 = sphi 0, %s90
      %s93 = sphi 0, %s92
      %s107 = sphi 0, %s93
      %s111 = sphi 0, %s111
      %s113 = sphi 0, %s111
      %s114 = sphi 0, %s113
      %s128 = sphi 0, %s114
      %s134 = sphi 0, %s136
      %s137 = sphi 0, %s134
      %s138 = sphi 0, %s137
      %s154 = sphi 0, %s138
    $region4: #{tpu_custom_call.1} parent=1 // loop_header_branch
      %17 = sbr.rel (%p15) target = $region8
    $region5: #{tpu_custom_call.1} parent=1 // loop_body
      %s19 = ssub.s32 %s14, 1
      %s20 = ssub.s32 %s14, 2
      %s21 = sadd.s32 %s14, 1
      %s22 = ssub.s32 %s14, %s21
      %p23 = scmp.eq.s32.totalorder %s22, 0
      %s25 = sadd.s32 %s24, 1
      %s26 = scalar_select %p23, %s24, %s25
      %p29 = pneg %p23
      %p30 = scmp.eq.s32.totalorder %s14, 1
      %p31 = por %p29, %p30
      %p32 = scmp.ne.s32.totalorder %s24, %s27
      %p33 = scmp.eq.s32.totalorder %s14, 0
      %p34 = por %p32, %p33
      %p35 = scmp.ne.s32.totalorder %s24, %s27
      %p36 = scmp.eq.s32.totalorder %s19, 1
      %p37 = por %p35, %p36
      %p38 = scmp.ne.s32.totalorder %s27, %s28
      %p39 = scmp.eq.s32.totalorder %s19, 0
      %p40 = por %p38, %p39
      %p41 = scmp.ne.s32.totalorder %s27, %s28
      %p42 = scmp.eq.s32.totalorder %s20, 1
      %p43 = por %p41, %p42
      %p45 = scmp.ne.s32.totalorder %s28, %s44
      %p46 = scmp.eq.s32.totalorder %s20, 0
      %p47 = por %p45, %p46
      %s49 = sadd.s32 %s48, 1
      %p52 = scmp.eq.s32.totalorder %s14, 1
      %p53 = scmp.ne.s32.totalorder %s48, %s50
      %p54 = scmp.eq.s32.totalorder %s14, 0
      %p55 = por %p53, %p54
      %p56 = scmp.ne.s32.totalorder %s48, %s50
      %p57 = scmp.eq.s32.totalorder %s19, 1
      %p58 = por %p56, %p57
      %p59 = scmp.ne.s32.totalorder %s50, %s51
      %p60 = scmp.eq.s32.totalorder %s19, 0
      %p61 = por %p59, %p60
      %p62 = scmp.ne.s32.totalorder %s50, %s51
      %p63 = scmp.eq.s32.totalorder %s20, 1
      %p64 = por %p62, %p63
      %p66 = scmp.ne.s32.totalorder %s51, %s65
      %p67 = scmp.eq.s32.totalorder %s20, 0
      %p68 = por %p66, %p67
      %s70 = sadd.s32 %s69, 1
      %p73 = scmp.eq.s32.totalorder %s14, 1
      %p74 = scmp.ne.s32.totalorder %s69, %s71
      %p75 = scmp.eq.s32.totalorder %s14, 0
      %p76 = por %p74, %p75
      %p77 = scmp.ne.s32.totalorder %s69, %s71
      %p78 = scmp.eq.s32.totalorder %s19, 1
      %p79 = por %p77, %p78
      %p80 = scmp.ne.s32.totalorder %s71, %s72
      %p81 = scmp.eq.s32.totalorder %s19, 0
      %p82 = por %p80, %p81
      %p83 = scmp.ne.s32.totalorder %s71, %s72
      %p84 = scmp.eq.s32.totalorder %s20, 1
      %p85 = por %p83, %p84
      %p87 = scmp.ne.s32.totalorder %s72, %s86
      %p88 = scmp.eq.s32.totalorder %s20, 0
      %p89 = por %p87, %p88
      %s91 = sadd.s32 %s90, 1
      %p94 = scmp.eq.s32.totalorder %s14, 1
      %p95 = scmp.ne.s32.totalorder %s90, %s92
      %p96 = scmp.eq.s32.totalorder %s14, 0
      %p97 = por %p95, %p96
      %p98 = scmp.ne.s32.totalorder %s90, %s92
      %p99 = scmp.eq.s32.totalorder %s19, 1
      %p100 = por %p98, %p99
      %p101 = scmp.ne.s32.totalorder %s92, %s93
      %p102 = scmp.eq.s32.totalorder %s19, 0
      %p103 = por %p101, %p102
      %p104 = scmp.ne.s32.totalorder %s92, %s93
      %p105 = scmp.eq.s32.totalorder %s20, 1
      %p106 = por %p104, %p105
      %p108 = scmp.ne.s32.totalorder %s93, %s107
      %p109 = scmp.eq.s32.totalorder %s20, 0
      %p110 = por %p108, %p109
      %s112 = sadd.s32 %s111, 1
      %p115 = scmp.eq.s32.totalorder %s14, 1
      %p116 = scmp.ne.s32.totalorder %s111, %s113
      %p117 = scmp.eq.s32.totalorder %s14, 0
      %p118 = por %p116, %p117
      %p119 = scmp.ne.s32.totalorder %s111, %s113
      %p120 = scmp.eq.s32.totalorder %s19, 1
      %p121 = por %p119, %p120
      %p122 = scmp.ne.s32.totalorder %s113, %s114
      %p123 = scmp.eq.s32.totalorder %s19, 0
      %p124 = por %p122, %p123
      %p125 = scmp.ne.s32.totalorder %s113, %s114
      %p126 = scmp.eq.s32.totalorder %s20, 1
      %p127 = por %p125, %p126
      %p129 = scmp.ne.s32.totalorder %s114, %s128
      %p130 = scmp.eq.s32.totalorder %s20, 0
      %p131 = por %p129, %p130
      %s132 = ssub.s32 %s14, %s21
      %p133 = scmp.eq.s32.totalorder %s132, 0
      %s135 = sadd.s32 %s134, 1
      %s136 = scalar_select %p133, %s134, %s135
      %p139 = pneg %p133
      %p140 = scmp.eq.s32.totalorder %s14, 1
      %p141 = por %p139, %p140
      %p142 = scmp.ne.s32.totalorder %s134, %s137
      %p143 = scmp.eq.s32.totalorder %s14, 0
      %p144 = por %p142, %p143
      %p145 = scmp.ne.s32.totalorder %s134, %s137
      %p146 = scmp.eq.s32.totalorder %s19, 1
      %p147 = por %p145, %p146
      %p148 = scmp.ne.s32.totalorder %s137, %s138
      %p149 = scmp.eq.s32.totalorder %s19, 0
      %p150 = por %p148, %p149
      %p151 = scmp.ne.s32.totalorder %s137, %s138
      %p152 = scmp.eq.s32.totalorder %s20, 1
      %p153 = por %p151, %p152
      %p155 = scmp.ne.s32.totalorder %s138, %s154
      %p156 = scmp.eq.s32.totalorder %s20, 0
      %p157 = por %p155, %p156
      %p158 = scmp.le.s32.totalorder 1, %s14
      %p159 = scmp.lt.s32.totalorder %s14, 3
      %p160 = pnand %p158, %p159
      %p161 = pneg %p160
      // Predicated region
      $region9: #{tpu_custom_call.1} parent=5 // pred_check
        _
      $region10: #{tpu_custom_call.1} parent=5 // pred_check_branch
        %163 = sbr.rel (%p160) target = $region12
      $region11: #{tpu_custom_call.1} parent=5 // pred_region
        %s164 = ssub.s32 %s14, 1
        // Predicated region
        $region13: #{tpu_custom_call.1} parent=11 // pred_check
          %p165 = pneg %p61
        $region14: #{tpu_custom_call.1} parent=11 // pred_check_branch
          %167 = sbr.rel (%p165) target = $region16
        $region15: #{tpu_custom_call.1} parent=11 // pred_region
          _
        $region16: #{tpu_custom_call.1} parent=11 // pred_fallthru
          _
        // Predicated region
        $region17: #{tpu_custom_call.1} parent=11 // pred_check
          %p168 = pneg %p82
        $region18: #{tpu_custom_call.1} parent=11 // pred_check_branch
          %170 = sbr.rel (%p168) target = $region20
        $region19: #{tpu_custom_call.1} parent=11 // pred_region
          _
        $region20: #{tpu_custom_call.1} parent=11 // pred_fallthru
          _
        // Predicated region
        $region21: #{tpu_custom_call.1} parent=11 // pred_check
          %p171 = pneg %p103
        $region22: #{tpu_custom_call.1} parent=11 // pred_check_branch
          %173 = sbr.rel (%p171) target = $region24
        $region23: #{tpu_custom_call.1} parent=11 // pred_region
          _
        $region24: #{tpu_custom_call.1} parent=11 // pred_fallthru
          _
        // Predicated region
        $region25: #{tpu_custom_call.1} parent=11 // pred_check
          %p174 = pneg %p124
        $region26: #{tpu_custom_call.1} parent=11 // pred_check_branch
          %176 = sbr.rel (%p174) target = $region28
        $region27: #{tpu_custom_call.1} parent=11 // pred_region
          _
        $region28: #{tpu_custom_call.1} parent=11 // pred_fallthru
          _
      $region12: #{tpu_custom_call.1} parent=5 // pred_fallthru
        _
      %p177 = scmp.lt.s32.totalorder %s14, 2
      // Predicated region
      $region29: #{tpu_custom_call.1} parent=5 // pred_check
        %p178 = pneg %p177
      $region30: #{tpu_custom_call.1} parent=5 // pred_check_branch
        %180 = sbr.rel (%p178) target = $region32
      $region31: #{tpu_custom_call.1} parent=5 // pred_region
        // Predicated region
        $region33: #{tpu_custom_call.1} parent=31 // pred_check
          %p181 = pneg %p34
        $region34: #{tpu_custom_call.1} parent=31 // pred_check_branch
          %183 = sbr.rel (%p181) target = $region36
        $region35: #{tpu_custom_call.1} parent=31 // pred_region
          %s184 = smul.u32 32, %s14
          %p185 = scmp.lt.s32.totalorder %s184, 63
          %s186 = scalar_select %p185, %s184, 63
          %s187 = smul.addr %s186, 8
          %s188 = scalar_lea.vmem %s0, %s187
          %s189 = smul.u32 32, %s14
        $region36: #{tpu_custom_call.1} parent=31 // pred_fallthru
          _
      $region32: #{tpu_custom_call.1} parent=5 // pred_fallthru
        _
      %p190 = scmp.le.s32.totalorder 1, %s14
      %p191 = scmp.lt.s32.totalorder %s14, 3
      %p192 = pnand %p190, %p191
      %p193 = pneg %p192
      // Predicated region
      $region37: #{tpu_custom_call.1} parent=5 // pred_check
        _
      $region38: #{tpu_custom_call.1} parent=5 // pred_check_branch
        %195 = sbr.rel (%p192) target = $region40
      $region39: #{tpu_custom_call.1} parent=5 // pred_region
        %s196 = ssub.s32 %s14, 1
        %s197 = smul.u32 32, %s19
        %p198 = scmp.lt.s32.totalorder %s197, 63
        %s199 = scalar_select %p198, %s197, 63
        %s200 = smul.addr %s199, 8
        %s201 = scalar_lea.vmem %s0, %s200
        %p202 = pneg %p40
        %p203 = pneg %p37
        %p204 = pneg %p61
        %p205 = pneg %p58
        %p206 = pneg %p82
        %p207 = pneg %p79
        %p208 = pneg %p103
        %p209 = pneg %p100
        %p210 = pneg %p124
        %p211 = pneg %p121
        %p212 = pneg %p150
        %p213 = pneg %p147
        %s214 = sand.u32 %s137, 1
        %s215 = scalar_lea.sflag [#allocation3], %s214
        %s216 = sand.u32 %s137, 1
        %s217 = smul.addr %s216, 16
        %s218 = scalar_lea.vmem [#allocation2], %s217
        %s219 = smul.u32 32, %s19
        %p220 = scmp.lt.s32.totalorder %s219, 63
        %s221 = scalar_select %p220, %s219, 63
        %s222 = smul.addr %s221, 8
        %s223 = scalar_lea.vmem %s0, %s222
        %s224 = smul.u32 32, %s19
        %s225 = smul.u32 2, %s19
        %v226 = vld [vmem:[%s223] sm:$0xff]
        %v227 = vld [vmem:[%s223 + $0x8] sm:$0xff]
        %v228 = vld [vmem:[%s223 + $0x10] sm:$0xff]
        %v229 = vld [vmem:[%s223 + $0x18] sm:$0xff]
        %v230 = vld [vmem:[%s223 + $0x20] sm:$0xff]
        %v231 = vld [vmem:[%s223 + $0x28] sm:$0xff]
        %v232 = vld [vmem:[%s223 + $0x30] sm:$0xff]
        %v233 = vld [vmem:[%s223 + $0x38] sm:$0xff]
        %v234 = vld [vmem:[%s223 + $0x40] sm:$0xff]
        %v235 = vld [vmem:[%s223 + $0x48] sm:$0xff]
        %v236 = vld [vmem:[%s223 + $0x50] sm:$0xff]
        %v237 = vld [vmem:[%s223 + $0x58] sm:$0xff]
        %v238 = vld [vmem:[%s223 + $0x60] sm:$0xff]
        %v239 = vld [vmem:[%s223 + $0x68] sm:$0xff]
        %v240 = vld [vmem:[%s223 + $0x70] sm:$0xff]
        %v241 = vld [vmem:[%s223 + $0x78] sm:$0xff]
        %v242 = vld [vmem:[%s223 + $0x80] sm:$0xff]
        %v243 = vld [vmem:[%s223 + $0x88] sm:$0xff]
        %v244 = vld [vmem:[%s223 + $0x90] sm:$0xff]
        %v245 = vld [vmem:[%s223 + $0x98] sm:$0xff]
        %v246 = vld [vmem:[%s223 + $0xa0] sm:$0xff]
        %v247 = vld [vmem:[%s223 + $0xa8] sm:$0xff]
        %v248 = vld [vmem:[%s223 + $0xb0] sm:$0xff]
        %v249 = vld [vmem:[%s223 + $0xb8] sm:$0xff]
        %v250 = vld [vmem:[%s223 + $0xc0] sm:$0xff]
        %v251 = vld [vmem:[%s223 + $0xc8] sm:$0xff]
        %v252 = vld [vmem:[%s223 + $0xd0] sm:$0xff]
        %v253 = vld [vmem:[%s223 + $0xd8] sm:$0xff]
        %v254 = vld [vmem:[%s223 + $0xe0] sm:$0xff]
        %v255 = vld [vmem:[%s223 + $0xe8] sm:$0xff]
        %v256 = vld [vmem:[%s223 + $0xf0] sm:$0xff]
        %v257 = vld [vmem:[%s223 + $0xf8] sm:$0xff]
        %v258 = vld [vmem:[%s1] sm:$0xff]
        %v259 = vld [vmem:[%s1 + $0x8] sm:$0x3]
        %v260 = vld [vmem:[%s2] sm:$0x1]
        %v262 = vlaneseq
        %v263 = vshrl.u32 %v262, 7
        %v264 = vsub.s32 0, %v263
        %v265 = vrot.slane %v260, %v264
        %vm267 = vcmask 80896
        %v269 = vsel %vm267, %v226, 0
        %v272 = vsel %vm267, %v227, 0
        %v275 = vsel %vm267, %v228, 0
        %v278 = vsel %vm267, %v229, 0
        %v281 = vsel %vm267, %v230, 0
        %v284 = vsel %vm267, %v231, 0
        %v287 = vsel %vm267, %v232, 0
        %v290 = vsel %vm267, %v233, 0
        %v293 = vsel %vm267, %v234, 0
        %v296 = vsel %vm267, %v235, 0
        %v299 = vsel %vm267, %v236, 0
        %v302 = vsel %vm267, %v237, 0
        %v305 = vsel %vm267, %v238, 0
        %v308 = vsel %vm267, %v239, 0
        %v311 = vsel %vm267, %v240, 0
        %v314 = vsel %vm267, %v241, 0
        %v317 = vsel %vm267, %v242, 0
        %v320 = vsel %vm267, %v243, 0
        %v323 = vsel %vm267, %v244, 0
        %v326 = vsel %vm267, %v245, 0
        %v329 = vsel %vm267, %v246, 0
        %v332 = vsel %vm267, %v247, 0
        %v335 = vsel %vm267, %v248, 0
        %v338 = vsel %vm267, %v249, 0
        %v341 = vsel %vm267, %v250, 0
        %v344 = vsel %vm267, %v251, 0
        %v347 = vsel %vm267, %v252, 0
        %v350 = vsel %vm267, %v253, 0
        %v353 = vsel %vm267, %v254, 0
        %v356 = vsel %vm267, %v255, 0
        %v359 = vsel %vm267, %v256, 0
        %v362 = vsel %vm267, %v257, 0
        %v365 = vsel %vm267, %v258, 0
        %v368 = vsel %vm267, %v259, 0
        %370 = vmatprep.subr.mxu0 0.0
        %371 = vmatpush1.xpose.msra.mxu0 %v365
        %372 = vmatprep.subr.mxu0 0.0
        %373 = vmatpush1.xpose.msra.mxu0 %v368
        %374 = vmatprep.subr.mxu0 0.0
        %375 = vmatpush1.xpose.msra.mxu0 0.0
        %376 = vmatprep.subr.mxu0 0.0
        %377 = vmatpush1.xpose.msra.mxu0 0.0
        %378 = vmatprep.subr.mxu0 0.0
        %379 = vmatpush1.xpose.msra.mxu0 0.0
        %380 = vmatprep.subr.mxu0 0.0
        %381 = vmatpush1.xpose.msra.mxu0 0.0
        %382 = vmatprep.subr.mxu0 0.0
        %383 = vmatpush1.xpose.msra.mxu0 0.0
        %384 = vmatprep.subr.mxu0 0.0
        %385 = vmatpush1.xpose.msra.mxu0 0.0
        %386 = vmatprep.subr.mxu0 0.0
        %387 = vmatpush1.xpose.msra.mxu0 0.0
        %388 = vmatprep.subr.mxu0 0.0
        %389 = vmatpush1.xpose.msra.mxu0 0.0
        %390 = vmatprep.subr.mxu0 0.0
        %391 = vmatpush1.xpose.msra.mxu0 0.0
        %392 = vmatprep.subr.mxu0 0.0
        %393 = vmatpush1.xpose.msra.mxu0 0.0
        %394 = vmatprep.subr.mxu0 0.0
        %395 = vmatpush1.xpose.msra.mxu0 0.0
        %396 = vmatprep.subr.mxu0 0.0
        %397 = vmatpush1.xpose.msra.mxu0 0.0
        %398 = vmatprep.subr.mxu0 0.0
        %399 = vmatpush1.xpose.msra.mxu0 0.0
        %400 = vmatprep.subr.mxu0 0.0
        %401 = vmatpush1.xpose.msra.mxu0 0.0
        %402 = vmatprep.subr.mxu0 0.0
        %403 = vmatpush1.xpose.msra.mxu0 0.0
        %404 = vmatprep.subr.mxu0 0.0
        %405 = vmatpush1.xpose.msra.mxu0 0.0
        %406 = vmatprep.subr.mxu0 0.0
        %407 = vmatpush1.xpose.msra.mxu0 0.0
        %408 = vmatprep.subr.mxu0 0.0
        %409 = vmatpush1.xpose.msra.mxu0 0.0
        %410 = vmatprep.subr.mxu0 0.0
        %411 = vmatpush1.xpose.msra.mxu0 0.0
        %412 = vmatprep.subr.mxu0 0.0
        %413 = vmatpush1.xpose.msra.mxu0 0.0
        %414 = vmatprep.subr.mxu0 0.0
        %415 = vmatpush1.xpose.msra.mxu0 0.0
        %416 = vmatprep.subr.mxu0 0.0
        %417 = vmatpush1.xpose.msra.mxu0 0.0
        %418 = vmatprep.subr.mxu0 0.0
        %419 = vmatpush1.xpose.msra.mxu0 0.0
        %420 = vmatprep.subr.mxu0 0.0
        %421 = vmatpush1.xpose.msra.mxu0 0.0
        %422 = vmatprep.subr.mxu0 0.0
        %423 = vmatpush1.xpose.msra.mxu0 0.0
        %424 = vmatprep.subr.mxu0 0.0
        %425 = vmatpush1.xpose.msra.mxu0 0.0
        %426 = vmatprep.subr.mxu0 0.0
        %427 = vmatpush1.xpose.msra.mxu0 0.0
        %428 = vmatprep.subr.mxu0 0.0
        %429 = vmatpush1.xpose.msra.mxu0 0.0
        %430 = vmatprep.subr.mxu0 0.0
        %431 = vmatpush1.xpose.msra.mxu0 0.0
        %432 = vmatprep.subr.mxu0 0.0
        %433 = vmatpush1.xpose.msra.mxu0 0.0
        %434 = vmatprep.mubr.f32.mxu0 0.0
        %435 = vmatmul.mubr.f32.gmra.mrb[0].mxu0 %v269
        %v436 = vpop.f32.mrb[0].mxu0
        %v437 = vadd.f32 %v265, %v436
        %v438 = vpop.f32.mrb[0].mxu0
        %439 = vmatprep.mubr.f32.mxu0 0.0
        %440 = vmatmul.mubr.f32.gmra.mrb[0].mxu0 %v272
        %v441 = vpop.f32.mrb[0].mxu0
        %v442 = vadd.f32 %v265, %v441
        %v443 = vpop.f32.mrb[0].mxu0
        %444 = vmatprep.mubr.f32.mxu0 0.0
        %445 = vmatmul.mubr.f32.gmra.mrb[0].mxu0 %v275
        %v446 = vpop.f32.mrb[0].mxu0
        %v447 = vadd.f32 %v265, %v446
        %v448 = vpop.f32.mrb[0].mxu0
        %449 = vmatprep.mubr.f32.mxu0 0.0
        %450 = vmatmul.mubr.f32.gmra.mrb[0].mxu0 %v278
        %v451 = vpop.f32.mrb[0].mxu0
        %v452 = vadd.f32 %v265, %v451
        %v453 = vpop.f32.mrb[0].mxu0
        %454 = vmatprep.mubr.f32.mxu0 0.0
        %455 = vmatmul.mubr.f32.gmra.mrb[0].mxu0 %v281
        %v456 = vpop.f32.mrb[0].mxu0
        %v457 = vadd.f32 %v265, %v456
        %v458 = vpop.f32.mrb[0].mxu0
        %459 = vmatprep.mubr.f32.mxu0 0.0
        %460 = vmatmul.mubr.f32.gmra.mrb[0].mxu0 %v284
        %v461 = vpop.f32.mrb[0].mxu0
        %v462 = vadd.f32 %v265, %v461
        %v463 = vpop.f32.mrb[0].mxu0
        %464 = vmatprep.mubr.f32.mxu0 0.0
        %465 = vmatmul.mubr.f32.gmra.mrb[0].mxu0 %v287
        %v466 = vpop.f32.mrb[0].mxu0
        %v467 = vadd.f32 %v265, %v466
        %v468 = vpop.f32.mrb[0].mxu0
        %469 = vmatprep.mubr.f32.mxu0 0.0
        %470 = vmatmul.mubr.f32.gmra.mrb[0].mxu0 %v290
        %v471 = vpop.f32.mrb[0].mxu0
        %v472 = vadd.f32 %v265, %v471
        %v473 = vpop.f32.mrb[0].mxu0
        %474 = vmatprep.mubr.f32.mxu0 0.0
        %475 = vmatmul.mubr.f32.gmra.mrb[0].mxu0 %v293
        %v476 = vpop.f32.mrb[0].mxu0
        %v477 = vadd.f32 %v265, %v476
        %v478 = vpop.f32.mrb[0].mxu0
        %479 = vmatprep.mubr.f32.mxu0 0.0
        %480 = vmatmul.mubr.f32.gmra.mrb[0].mxu0 %v296
        %v481 = vpop.f32.mrb[0].mxu0
        %v482 = vadd.f32 %v265, %v481
        %v483 = vpop.f32.mrb[0].mxu0
        %484 = vmatprep.mubr.f32.mxu0 0.0
        %485 = vmatmul.mubr.f32.gmra.mrb[0].mxu0 %v299
        %v486 = vpop.f32.mrb[0].mxu0
        %v487 = vadd.f32 %v265, %v486
        %v488 = vpop.f32.mrb[0].mxu0
        %489 = vmatprep.mubr.f32.mxu0 0.0
        %490 = vmatmul.mubr.f32.gmra.mrb[0].mxu0 %v302
        %v491 = vpop.f32.mrb[0].mxu0
        %v492 = vadd.f32 %v265, %v491
        %v493 = vpop.f32.mrb[0].mxu0
        %494 = vmatprep.mubr.f32.mxu0 0.0
        %495 = vmatmul.mubr.f32.gmra.mrb[0].mxu0 %v305
        %v496 = vpop.f32.mrb[0].mxu0
        %v497 = vadd.f32 %v265, %v496
        %v498 = vpop.f32.mrb[0].mxu0
        %499 = vmatprep.mubr.f32.mxu0 0.0
        %500 = vmatmul.mubr.f32.gmra.mrb[0].mxu0 %v308
        %v501 = vpop.f32.mrb[0].mxu0
        %v502 = vadd.f32 %v265, %v501
        %v503 = vpop.f32.mrb[0].mxu0
        %504 = vmatprep.mubr.f32.mxu0 0.0
        %505 = vmatmul.mubr.f32.gmra.mrb[0].mxu0 %v311
        %v506 = vpop.f32.mrb[0].mxu0
        %v507 = vadd.f32 %v265, %v506
        %v508 = vpop.f32.mrb[0].mxu0
        %509 = vmatprep.mubr.f32.mxu0 0.0
        %510 = vmatmul.mubr.f32.gmra.mrb[0].mxu0 %v314
        %v511 = vpop.f32.mrb[0].mxu0
        %v512 = vadd.f32 %v265, %v511
        %v513 = vpop.f32.mrb[0].mxu0
        %514 = vmatprep.mubr.f32.mxu0 0.0
        %515 = vmatmul.mubr.f32.gmra.mrb[0].mxu0 %v317
        %v516 = vpop.f32.mrb[0].mxu0
        %v517 = vadd.f32 %v265, %v516
        %v518 = vpop.f32.mrb[0].mxu0
        %519 = vmatprep.mubr.f32.mxu0 0.0
        %520 = vmatmul.mubr.f32.gmra.mrb[0].mxu0 %v320
        %v521 = vpop.f32.mrb[0].mxu0
        %v522 = vadd.f32 %v265, %v521
        %v523 = vpop.f32.mrb[0].mxu0
        %524 = vmatprep.mubr.f32.mxu0 0.0
        %525 = vmatmul.mubr.f32.gmra.mrb[0].mxu0 %v323
        %v526 = vpop.f32.mrb[0].mxu0
        %v527 = vadd.f32 %v265, %v526
        %v528 = vpop.f32.mrb[0].mxu0
        %529 = vmatprep.mubr.f32.mxu0 0.0
        %530 = vmatmul.mubr.f32.gmra.mrb[0].mxu0 %v326
        %v531 = vpop.f32.mrb[0].mxu0
        %v532 = vadd.f32 %v265, %v531
        %v533 = vpop.f32.mrb[0].mxu0
        %534 = vmatprep.mubr.f32.mxu0 0.0
        %535 = vmatmul.mubr.f32.gmra.mrb[0].mxu0 %v329
        %v536 = vpop.f32.mrb[0].mxu0
        %v537 = vadd.f32 %v265, %v536
        %v538 = vpop.f32.mrb[0].mxu0
        %539 = vmatprep.mubr.f32.mxu0 0.0
        %540 = vmatmul.mubr.f32.gmra.mrb[0].mxu0 %v332
        %v541 = vpop.f32.mrb[0].mxu0
        %v542 = vadd.f32 %v265, %v541
        %v543 = vpop.f32.mrb[0].mxu0
        %544 = vmatprep.mubr.f32.mxu0 0.0
        %545 = vmatmul.mubr.f32.gmra.mrb[0].mxu0 %v335
        %v546 = vpop.f32.mrb[0].mxu0
        %v547 = vadd.f32 %v265, %v546
        %v548 = vpop.f32.mrb[0].mxu0
        %549 = vmatprep.mubr.f32.mxu0 0.0
        %550 = vmatmul.mubr.f32.gmra.mrb[0].mxu0 %v338
        %v551 = vpop.f32.mrb[0].mxu0
        %v552 = vadd.f32 %v265, %v551
        %v553 = vpop.f32.mrb[0].mxu0
        %554 = vmatprep.mubr.f32.mxu0 0.0
        %555 = vmatmul.mubr.f32.gmra.mrb[0].mxu0 %v341
        %v556 = vpop.f32.mrb[0].mxu0
        %v557 = vadd.f32 %v265, %v556
        %v558 = vpop.f32.mrb[0].mxu0
        %559 = vmatprep.mubr.f32.mxu0 0.0
        %560 = vmatmul.mubr.f32.gmra.mrb[0].mxu0 %v344
        %v561 = vpop.f32.mrb[0].mxu0
        %v562 = vadd.f32 %v265, %v561
        %v563 = vpop.f32.mrb[0].mxu0
        %564 = vmatprep.mubr.f32.mxu0 0.0
        %565 = vmatmul.mubr.f32.gmra.mrb[0].mxu0 %v347
        %v566 = vpop.f32.mrb[0].mxu0
        %v567 = vadd.f32 %v265, %v566
        %v568 = vpop.f32.mrb[0].mxu0
        %569 = vmatprep.mubr.f32.mxu0 0.0
        %570 = vmatmul.mubr.f32.gmra.mrb[0].mxu0 %v350
        %v571 = vpop.f32.mrb[0].mxu0
        %v572 = vadd.f32 %v265, %v571
        %v573 = vpop.f32.mrb[0].mxu0
        %574 = vmatprep.mubr.f32.mxu0 0.0
        %575 = vmatmul.mubr.f32.gmra.mrb[0].mxu0 %v353
        %v576 = vpop.f32.mrb[0].mxu0
        %v577 = vadd.f32 %v265, %v576
        %v578 = vpop.f32.mrb[0].mxu0
        %579 = vmatprep.mubr.f32.mxu0 0.0
        %580 = vmatmul.mubr.f32.gmra.mrb[0].mxu0 %v356
        %v581 = vpop.f32.mrb[0].mxu0
        %v582 = vadd.f32 %v265, %v581
        %v583 = vpop.f32.mrb[0].mxu0
        %584 = vmatprep.mubr.f32.mxu0 0.0
        %585 = vmatmul.mubr.f32.gmra.mrb[0].mxu0 %v359
        %v586 = vpop.f32.mrb[0].mxu0
        %v587 = vadd.f32 %v265, %v586
        %v588 = vpop.f32.mrb[0].mxu0
        %589 = vmatprep.mubr.f32.mxu0 0.0
        %590 = vmatmul.mubr.f32.gmra.mrb[0].mxu0 %v362
        %v591 = vpop.f32.mrb[0].mxu0
        %v592 = vadd.f32 %v265, %v591
        %v593 = vpop.f32.mrb[0].mxu0
        %594 = vdwg.mxu0
        %v595 = vmax.f32 %v437, 0.0
        %v596 = vmax.f32 %v442, 0.0
        %v597 = vmax.f32 %v447, 0.0
        %v598 = vmax.f32 %v452, 0.0
        %v599 = vmax.f32 %v457, 0.0
        %v600 = vmax.f32 %v462, 0.0
        %v601 = vmax.f32 %v467, 0.0
        %v602 = vmax.f32 %v472, 0.0
        %v603 = vmax.f32 %v477, 0.0
        %v604 = vmax.f32 %v482, 0.0
        %v605 = vmax.f32 %v487, 0.0
        %v606 = vmax.f32 %v492, 0.0
        %v607 = vmax.f32 %v497, 0.0
        %v608 = vmax.f32 %v502, 0.0
        %v609 = vmax.f32 %v507, 0.0
        %v610 = vmax.f32 %v512, 0.0
        %v611 = vmax.f32 %v517, 0.0
        %v612 = vmax.f32 %v522, 0.0
        %v613 = vmax.f32 %v527, 0.0
        %v614 = vmax.f32 %v532, 0.0
        %v615 = vmax.f32 %v537, 0.0
        %v616 = vmax.f32 %v542, 0.0
        %v617 = vmax.f32 %v547, 0.0
        %v618 = vmax.f32 %v552, 0.0
        %v619 = vmax.f32 %v557, 0.0
        %v620 = vmax.f32 %v562, 0.0
        %v621 = vmax.f32 %v567, 0.0
        %v622 = vmax.f32 %v572, 0.0
        %v623 = vmax.f32 %v577, 0.0
        %v624 = vmax.f32 %v582, 0.0
        %v625 = vmax.f32 %v587, 0.0
        %v626 = vmax.f32 %v592, 0.0
        %v627 = vld [vmem:[%s3] sm:$0xff]
        %v628 = vld [vmem:[%s4] sm:$0xff]
        %630 = vset.pattern.permute.xlu0 0
        %631 = vperm.xlu0 %630, %v628
        %v632 = vpop.permute.xlu0 %631
        %v635 = vsel %vm267, %v627, 0
        %v638 = vsel %vm267, %v595, 0
        %v641 = vsel %vm267, %v596, 0
        %v644 = vsel %vm267, %v597, 0
        %v647 = vsel %vm267, %v598, 0
        %v650 = vsel %vm267, %v599, 0
        %v653 = vsel %vm267, %v600, 0
        %v656 = vsel %vm267, %v601, 0
        %v659 = vsel %vm267, %v602, 0
        %v662 = vsel %vm267, %v603, 0
        %v665 = vsel %vm267, %v604, 0
        %v668 = vsel %vm267, %v605, 0
        %v671 = vsel %vm267, %v606, 0
        %v674 = vsel %vm267, %v607, 0
        %v677 = vsel %vm267, %v608, 0
        %v680 = vsel %vm267, %v609, 0
        %v683 = vsel %vm267, %v610, 0
        %v686 = vsel %vm267, %v611, 0
        %v689 = vsel %vm267, %v612, 0
        %v692 = vsel %vm267, %v613, 0
        %v695 = vsel %vm267, %v614, 0
        %v698 = vsel %vm267, %v615, 0
        %v701 = vsel %vm267, %v616, 0
        %v704 = vsel %vm267, %v617, 0
        %v707 = vsel %vm267, %v618, 0
        %v710 = vsel %vm267, %v619, 0
        %v713 = vsel %vm267, %v620, 0
        %v716 = vsel %vm267, %v621, 0
        %v719 = vsel %vm267, %v622, 0
        %v722 = vsel %vm267, %v623, 0
        %v725 = vsel %vm267, %v624, 0
        %v728 = vsel %vm267, %v625, 0
        %v731 = vsel %vm267, %v626, 0
        %733 = vmatprep.subr.mxu0 0.0
        %734 = vmatpush1.xpose.msra.mxu0 %v638
        %735 = vmatprep.subr.mxu0 0.0
        %736 = vmatpush1.xpose.msra.mxu0 %v641
        %737 = vmatprep.subr.mxu0 0.0
        %738 = vmatpush1.xpose.msra.mxu0 %v644
        %739 = vmatprep.subr.mxu0 0.0
        %740 = vmatpush1.xpose.msra.mxu0 %v647
        %741 = vmatprep.subr.mxu0 0.0
        %742 = vmatpush1.xpose.msra.mxu0 %v650
        %743 = vmatprep.subr.mxu0 0.0
        %744 = vmatpush1.xpose.msra.mxu0 %v653
        %745 = vmatprep.subr.mxu0 0.0
        %746 = vmatpush1.xpose.msra.mxu0 %v656
        %747 = vmatprep.subr.mxu0 0.0
        %748 = vmatpush1.xpose.msra.mxu0 %v659
        %749 = vmatprep.subr.mxu0 0.0
        %750 = vmatpush1.xpose.msra.mxu0 %v662
        %751 = vmatprep.subr.mxu0 0.0
        %752 = vmatpush1.xpose.msra.mxu0 %v665
        %753 = vmatprep.subr.mxu0 0.0
        %754 = vmatpush1.xpose.msra.mxu0 %v668
        %755 = vmatprep.subr.mxu0 0.0
        %756 = vmatpush1.xpose.msra.mxu0 %v671
        %757 = vmatprep.subr.mxu0 0.0
        %758 = vmatpush1.xpose.msra.mxu0 %v674
        %759 = vmatprep.subr.mxu0 0.0
        %760 = vmatpush1.xpose.msra.mxu0 %v677
        %761 = vmatprep.subr.mxu0 0.0
        %762 = vmatpush1.xpose.msra.mxu0 %v680
        %763 = vmatprep.subr.mxu0 0.0
        %764 = vmatpush1.xpose.msra.mxu0 %v683
        %765 = vmatprep.subr.mxu0 0.0
        %766 = vmatpush1.xpose.msra.mxu0 %v686
        %767 = vmatprep.subr.mxu0 0.0
        %768 = vmatpush1.xpose.msra.mxu0 %v689
        %769 = vmatprep.subr.mxu0 0.0
        %770 = vmatpush1.xpose.msra.mxu0 %v692
        %771 = vmatprep.subr.mxu0 0.0
        %772 = vmatpush1.xpose.msra.mxu0 %v695
        %773 = vmatprep.subr.mxu0 0.0
        %774 = vmatpush1.xpose.msra.mxu0 %v698
        %775 = vmatprep.subr.mxu0 0.0
        %776 = vmatpush1.xpose.msra.mxu0 %v701
        %777 = vmatprep.subr.mxu0 0.0
        %778 = vmatpush1.xpose.msra.mxu0 %v704
        %779 = vmatprep.subr.mxu0 0.0
        %780 = vmatpush1.xpose.msra.mxu0 %v707
        %781 = vmatprep.subr.mxu0 0.0
        %782 = vmatpush1.xpose.msra.mxu0 %v710
        %783 = vmatprep.subr.mxu0 0.0
        %784 = vmatpush1.xpose.msra.mxu0 %v713
        %785 = vmatprep.subr.mxu0 0.0
        %786 = vmatpush1.xpose.msra.mxu0 %v716
        %787 = vmatprep.subr.mxu0 0.0
        %788 = vmatpush1.xpose.msra.mxu0 %v719
        %789 = vmatprep.subr.mxu0 0.0
        %790 = vmatpush1.xpose.msra.mxu0 %v722
        %791 = vmatprep.subr.mxu0 0.0
        %792 = vmatpush1.xpose.msra.mxu0 %v725
        %793 = vmatprep.subr.mxu0 0.0
        %794 = vmatpush1.xpose.msra.mxu0 %v728
        %795 = vmatprep.subr.mxu0 0.0
        %796 = vmatpush1.xpose.msra.mxu0 %v731
        %797 = vmatprep.mubr.f32.mxu0 0.0
        %798 = vmatmul.mubr.f32.gmra.mrb[0].mxu0 %v635
        %v799 = vpop.f32.mrb[0].mxu0
        %v800 = vadd.f32 %v632, %v799
        %v801 = vpop.f32.mrb[0].mxu0
        %v802 = vadd.f32 %v632, %v801
        %803 = vdwg.mxu0
        %804 = vst [vmem:[%s218] sm:$0xff] %v800
        %805 = vst [vmem:[%s218 + $0x8] sm:$0xff] %v802
        %s806 = sand.u32 %s137, 1
        %s807 = scalar_lea.sflag [#allocation3], %s806
        %s808 = sand.u32 %s137, 1
        %s809 = smul.addr %s808, 16
        %s810 = scalar_lea.vmem [#allocation2], %s809
        // Predicated region
        $region41: #{tpu_custom_call.1} parent=39 // pred_check
          %p811 = pneg %p147
        $region42: #{tpu_custom_call.1} parent=39 // pred_check_branch
          %813 = sbr.rel (%p811) target = $region44
        $region43: #{tpu_custom_call.1} parent=39 // pred_region
          %s814 = smul.u32 2, %s19
          %s816 = ssub.s32 256, 256
          %817 = vsyncadd %s807, %s816
          %s818 = smul.addr %s814, 128
          %s819 = scalar_lea.hbm %s5, %s818
          %s821 = sshll.u32 %s810, 4
          %s822 = int_to_ptr.vmem [resolvable:$true] %s821
          %824 = dma.vmem_to_hbm [thread:$0]  %s822, 256, %s819, %s807
        $region44: #{tpu_custom_call.1} parent=39 // pred_fallthru
          _
      $region40: #{tpu_custom_call.1} parent=5 // pred_fallthru
        _
      %p825 = scmp.le.s32.totalorder 2, %s14
      // Predicated region
      $region45: #{tpu_custom_call.1} parent=5 // pred_check
        %p826 = pneg %p825
      $region46: #{tpu_custom_call.1} parent=5 // pred_check_branch
        %828 = sbr.rel (%p826) target = $region48
      $region47: #{tpu_custom_call.1} parent=5 // pred_region
        %s829 = ssub.s32 %s14, 2
        // Predicated region
        $region49: #{tpu_custom_call.1} parent=47 // pred_check
          %p830 = pneg %p153
        $region50: #{tpu_custom_call.1} parent=47 // pred_check_branch
          %832 = sbr.rel (%p830) target = $region52
        $region51: #{tpu_custom_call.1} parent=47 // pred_region
          %s833 = sand.u32 %s138, 1
          %s834 = scalar_lea.sflag [#allocation3], %s833
          %s835 = sand.u32 %s138, 1
          %s836 = smul.addr %s835, 16
          %s837 = scalar_lea.vmem [#allocation2], %s836
          %838 = dma.done %s834, 256
        $region52: #{tpu_custom_call.1} parent=47 // pred_fallthru
          _
      $region48: #{tpu_custom_call.1} parent=5 // pred_fallthru
        _
    $region6: #{tpu_custom_call.1} parent=1 // loop_footer
      %s18 = sadd.s32 1, %s14
    $region7: #{tpu_custom_call.1} parent=1 // loop_footer_branch
      %13 = sbr.rel target = $region3
    $region8: #{tpu_custom_call.1} parent=1 // loop_exit
      _
    %839 = vsyncpa [#allocation3], 1
    %s840 = scalar_lea.sflag [#allocation3], 1
    %841 = vsyncpa %s840, 1

</llo_original>
